<compile_context>
chip_gen: v5e
topology: v5e:2x2
jax: 0.10.0
libtpu: 0.0.40
codegen_flags: <defaults>
</compile_context>

<pallas_src>
import functools

import jax
import jax.numpy as jnp
from jax.experimental import pallas as pl
from jax.experimental.pallas import tpu as pltpu

_EPS_SQ = 1e-24  # (torch F.normalize eps = 1e-12)^2, clamp on sum-of-squares


def _struct_dti_head_kernel(h_ref, t_ref, wq_ref, wk_ref, cb_ref, ca_ref,
                            wo_ref, bo_ref, out_ref, *, matmul_dtype):
    f32 = jnp.float32
    h = h_ref[...].astype(f32)                        # (bt, S, D)  drug block reps
    t = t_ref[...].astype(f32)                        # (bt, S, D)  target block reps
    D = h.shape[-1]

    hm = h.astype(matmul_dtype)
    tm = t.astype(matmul_dtype)
    wq = wq_ref[...].astype(matmul_dtype)             # (D, D2)
    wk = wk_ref[...].astype(matmul_dtype)             # (D, D2)
    cb = cb_ref[...].astype(f32)                      # (1, D2)
    ca = ca_ref[...].astype(f32)                      # (1, D2)
    wo = wo_ref[...].astype(f32)                      # (1, 2D)
    bo = bo_ref[...].astype(f32)                      # (1, 1)

    # ---- CoAttentionLayer(receiver=drug, attendant=target) ------------------
    keys = jnp.einsum("bsd,de->bse", hm, wk, preferred_element_type=f32)   # (bt,S,D2)
    qrs = jnp.einsum("bsd,de->bse", tm, wq, preferred_element_type=f32)    # (bt,S,D2)
    e = qrs[:, None, :, :] + keys[:, :, None, :] + cb                      # (bt,S,S,D2)
    att = jnp.sum(jnp.tanh(e) * ca, axis=-1)                               # (bt,S,S)

    # ---- RESCAL --------------------------------------------------------------
    inv_h = jax.lax.rsqrt(jnp.maximum(jnp.sum(h * h, axis=-1, keepdims=True), _EPS_SQ))
    inv_t = jax.lax.rsqrt(jnp.maximum(jnp.sum(t * t, axis=-1, keepdims=True), _EPS_SQ))
    hn = (h * inv_h).astype(matmul_dtype)
    tn = (t * inv_t).astype(matmul_dtype)
    base = jnp.einsum("bsd,btd->bst", hn, tn, preferred_element_type=f32)  # (bt,S,S)
    scores = att * base
    scores2 = att * jnp.swapaxes(base, -1, -2)       # tails @ heads^T == base^T

    # ---- readout + output MLP ------------------------------------------------
    f1 = jnp.einsum("bij,bjd->bid", scores.astype(matmul_dtype), tm,
                    preferred_element_type=f32)       # scores  @ kge_target
    f2 = jnp.einsum("bij,bjd->bid", scores2.astype(matmul_dtype), hm,
                    preferred_element_type=f32)       # scores2 @ kge_drug
    g1 = jnp.maximum(jnp.sum(f1, axis=-2), 0.0)       # ReLU(sum over blocks), (bt, D)
    g2 = jnp.maximum(jnp.sum(f2, axis=-2), 0.0)       # (bt, D)
    # Linear(2D -> 1): split weight row, VPU multiply + lane reduce (no concat).
    o = jnp.sum(g1 * wo[:, :D] + g2 * wo[:, D:], axis=-1, keepdims=True) + bo
    out_ref[...] = o.astype(out_ref.dtype)


def struct_dti_score_head(repr_h, repr_t, w_q, w_k, co_bias, co_a,
                          out_weight, out_bias, *, task="repr",
                          matmul_dtype=jnp.bfloat16,
                          temp_vmem_budget_bytes=12 * 1024 * 1024):
    """Fused StructDTI scoring head.

    repr_h, repr_t : [B, S, D]   (B pairs, S = n_blocks, D = kge_dim)
    w_q, w_k       : [D, D//2]   CoAttention projections
    co_bias, co_a  : [D//2]      CoAttention bias / scoring vector
    out_weight     : [1, 2*D]    final Linear weight (torch layout [out, in])
    out_bias       : [1]         final Linear bias
    """
    B, S, D = repr_h.shape
    D2 = w_q.shape[-1]
    assert repr_t.shape == (B, S, D)
    assert w_q.shape == (D, D2) and w_k.shape == (D, D2)
    assert co_bias.shape[-1] == D2 and co_a.shape[-1] == D2
    assert out_weight.shape == (1, 2 * D) and out_bias.shape == (1,)

    cb2 = co_bias.reshape(1, D2).astype(jnp.float32)
    ca2 = co_a.reshape(1, D2).astype(jnp.float32)
    wo2 = out_weight.reshape(1, 2 * D).astype(jnp.float32)
    bo2 = out_bias.reshape(1, 1).astype(jnp.float32)

    # Padded (sublane=8, lane=128) f32 estimate of per-batch-element temporaries.
    rup = lambda x, m: ((x + m - 1) // m) * m
    lane_D, lane_D2, lane_S, sub_S = rup(D, 128), rup(D2, 128), rup(S, 128), rup(S, 8)
    per_elem_tmp = 4 * (10 * sub_S * lane_D            # h,t,hn,tn,f1,f2 + bf16 copies
                        + (S + 4) * sub_S * lane_D2    # keys, queries, tanh(e) 4-D temp
                        + 8 * sub_S * lane_S)          # att, base, scores, scores2
    bt = int(max(1, min(B, temp_vmem_budget_bytes // max(per_elem_tmp, 1))))
    if bt < B:
        bt = min(B, max(8, (bt // 8) * 8))   # keep the (bt, 1) output block sublane-aligned
    grid = (pl.cdiv(B, bt),)

    feat_spec = pl.BlockSpec((bt, S, D), lambda i: (i, 0, 0))
    w_spec = pl.BlockSpec((D, D2), lambda i: (0, 0))
    d2_row_spec = pl.BlockSpec((1, D2), lambda i: (0, 0))
    wo_spec = pl.BlockSpec((1, 2 * D), lambda i: (0, 0))
    bo_spec = pl.BlockSpec((1, 1), lambda i: (0, 0))
    out_spec = pl.BlockSpec((bt, 1), lambda i: (i, 0))

    block_bytes = 4 * bt * 2 * sub_S * lane_D + 4 * (2 * D * lane_D2 + 4 * lane_D2 + 4 * lane_D) + 4 * bt
    vmem_limit = int(min(32 * 1024 * 1024,
                         max(16 * 1024 * 1024,
                             2 * block_bytes + bt * per_elem_tmp + (2 << 20))))

    kernel = functools.partial(_struct_dti_head_kernel, matmul_dtype=matmul_dtype)

    out = pl.pallas_call(
        kernel,
        out_shape=jax.ShapeDtypeStruct((B, 1), repr_h.dtype),
        grid_spec=pltpu.PrefetchScalarGridSpec(
            num_scalar_prefetch=0,
            grid=grid,
            in_specs=[feat_spec, feat_spec, w_spec, w_spec,
                      d2_row_spec, d2_row_spec, wo_spec, bo_spec],
            out_specs=out_spec,
        ),
        compiler_params=pltpu.CompilerParams(
            dimension_semantics=("parallel",),   # batch tiles are independent
            vmem_limit_bytes=vmem_limit,
        ),
    )(repr_h, repr_t, w_q, w_k, cb2, ca2, wo2, bo2)

    if task == "repr":
        return out[:, 0]        # == out_features.sum(-1) on a [B, 1] tensor
    return out


def _reference(repr_h, repr_t, w_q, w_k, co_bias, co_a, out_weight, out_bias,
               task="repr"):
    """Pure-JAX replica of the PyTorch head (CoAttention + RESCAL + out MLP)."""
    hp = jax.lax.Precision.HIGHEST
    keys = jnp.einsum("bsd,de->bse", repr_h, w_k, precision=hp)
    queries = jnp.einsum("bsd,de->bse", repr_t, w_q, precision=hp)
    e = queries[:, None, :, :] + keys[:, :, None, :] + co_bias
    att = jnp.sum(jnp.tanh(e) * co_a, axis=-1)

    eps = 1e-12
    hn = repr_h / jnp.maximum(jnp.linalg.norm(repr_h, axis=-1, keepdims=True), eps)
    tn = repr_t / jnp.maximum(jnp.linalg.norm(repr_t, axis=-1, keepdims=True), eps)
    scores = att * jnp.einsum("bsd,btd->bst", hn, tn, precision=hp)
    scores2 = att * jnp.einsum("bsd,btd->bst", tn, hn, precision=hp)

    feat = jnp.concatenate(
        [jnp.einsum("bij,bjd->bid", scores, repr_t, precision=hp),
         jnp.einsum("bij,bjd->bid", scores2, repr_h, precision=hp)],
        axis=-1).sum(axis=-2)
    out = jnp.einsum("bf,of->bo", jax.nn.relu(feat), out_weight, precision=hp) + out_bias
    if task == "repr":
        out = out.sum(-1)
    return out


if __name__ == "__main__":
    key = jax.random.PRNGKey(0)
    ks = jax.random.split(key, 8)

    # B = drug/target pairs, S = n_blocks of stacked block reps, D = kge_dim.
    B, S, D = 4, 4, 64
    D2 = D // 2
    repr_h = jax.random.normal(ks[0], (B, S, D), dtype=jnp.float32)
    repr_t = jax.random.normal(ks[1], (B, S, D), dtype=jnp.float32)
    # Xavier-ish parameter init.
    w_q = jax.random.normal(ks[2], (D, D2), jnp.float32) * (2.0 / (D + D2)) ** 0.5
    w_k = jax.random.normal(ks[3], (D, D2), jnp.float32) * (2.0 / (D + D2)) ** 0.5
    co_bias = jax.random.normal(ks[4], (D2,), jnp.float32) * 0.1
    co_a = jax.random.normal(ks[5], (D2,), jnp.float32) * 0.1
    out_w = jax.random.normal(ks[6], (1, 2 * D), jnp.float32) * (1.0 / (2 * D)) ** 0.5
    out_b = jax.random.normal(ks[7], (1,), jnp.float32) * 0.1

    ref = _reference(repr_h, repr_t, w_q, w_k, co_bias, co_a, out_w, out_b)

    # Exact (f32 MXU) path: tight agreement with the reference.
    out_f32 = struct_dti_score_head(repr_h, repr_t, w_q, w_k, co_bias, co_a,
                                    out_w, out_b, matmul_dtype=jnp.float32)
    jax.block_until_ready(out_f32)
    assert out_f32.shape == (B,)
    assert jnp.allclose(out_f32, ref, atol=2e-3, rtol=2e-3)

    # Default path: bf16 MXU operands, f32 accumulation (loose, scale-aware check).
    out_bf16 = struct_dti_score_head(repr_h, repr_t, w_q, w_k, co_bias, co_a,
                                     out_w, out_b)
    jax.block_until_ready(out_bf16)
    tol = 0.05 * float(jnp.max(jnp.abs(ref))) + 0.05
    assert jnp.allclose(out_bf16, ref, atol=tol, rtol=0.0)

    # task != 'repr' path returns [B, 1].
    out_full = struct_dti_score_head(repr_h, repr_t, w_q, w_k, co_bias, co_a,
                                     out_w, out_b, task="score",
                                     matmul_dtype=jnp.float32)
    jax.block_until_ready(out_full)
    assert out_full.shape == (B, 1)

    print("KERNEL_OK")
</pallas_src>

<mosaic_0001>
module attributes {stable_mosaic.version = 11 : i64} {
  func.func @_struct_dti_head_kernel(%arg0: i32, %arg1: memref<4x4x64xf32, #tpu.memory_space<vmem>>, %arg2: memref<4x4x64xf32, #tpu.memory_space<vmem>>, %arg3: memref<64x32xf32, #tpu.memory_space<vmem>>, %arg4: memref<64x32xf32, #tpu.memory_space<vmem>>, %arg5: memref<1x32xf32, #tpu.memory_space<vmem>>, %arg6: memref<1x32xf32, #tpu.memory_space<vmem>>, %arg7: memref<1x128xf32, #tpu.memory_space<vmem>>, %arg8: memref<1x1xf32, #tpu.memory_space<vmem>>, %arg9: memref<4x1xf32, #tpu.memory_space<vmem>>) attributes {dimension_semantics = [#tpu.dimension_semantics<parallel>], iteration_bounds = array<i64: 1>, scalar_prefetch = 0 : i64, scratch_operands = 0 : i64, tpu.core_type = #tpu.core_type<tc>, window_params = [{transform_indices = @transform_0, window_bounds = array<i64: 4, 4, 64>}, {transform_indices = @transform_1, window_bounds = array<i64: 4, 4, 64>}, {pipeline_mode = #tpu.pipeline_mode<synchronous>, transform_indices = @transform_2, window_bounds = array<i64: 64, 32>}, {pipeline_mode = #tpu.pipeline_mode<synchronous>, transform_indices = @transform_3, window_bounds = array<i64: 64, 32>}, {pipeline_mode = #tpu.pipeline_mode<synchronous>, transform_indices = @transform_4, window_bounds = array<i64: 1, 32>}, {pipeline_mode = #tpu.pipeline_mode<synchronous>, transform_indices = @transform_5, window_bounds = array<i64: 1, 32>}, {pipeline_mode = #tpu.pipeline_mode<synchronous>, transform_indices = @transform_6, window_bounds = array<i64: 1, 128>}, {pipeline_mode = #tpu.pipeline_mode<synchronous>, transform_indices = @transform_7, window_bounds = array<i64: 1, 1>}, {transform_indices = @transform_8, window_bounds = array<i64: 4, 1>}]} {
    %c0 = arith.constant 0 : index
    %c0_0 = arith.constant 0 : index
    %c0_1 = arith.constant 0 : index
    %0 = vector.load %arg1[%c0, %c0_0, %c0_1] : memref<4x4x64xf32, #tpu.memory_space<vmem>>, vector<4x4x64xf32>
    %c0_2 = arith.constant 0 : index
    %c0_3 = arith.constant 0 : index
    %c0_4 = arith.constant 0 : index
    %1 = vector.load %arg2[%c0_2, %c0_3, %c0_4] : memref<4x4x64xf32, #tpu.memory_space<vmem>>, vector<4x4x64xf32>
    %c0_5 = arith.constant 0 : index
    %c0_6 = arith.constant 0 : index
    %2 = vector.load %arg3[%c0_5, %c0_6] : memref<64x32xf32, #tpu.memory_space<vmem>>, vector<64x32xf32>
    %c0_7 = arith.constant 0 : index
    %c0_8 = arith.constant 0 : index
    %3 = vector.load %arg4[%c0_7, %c0_8] : memref<64x32xf32, #tpu.memory_space<vmem>>, vector<64x32xf32>
    %c0_9 = arith.constant 0 : index
    %c0_10 = arith.constant 0 : index
    %4 = vector.load %arg5[%c0_9, %c0_10] : memref<1x32xf32, #tpu.memory_space<vmem>>, vector<1x32xf32>
    %c0_11 = arith.constant 0 : index
    %c0_12 = arith.constant 0 : index
    %5 = vector.load %arg6[%c0_11, %c0_12] : memref<1x32xf32, #tpu.memory_space<vmem>>, vector<1x32xf32>
    %c0_13 = arith.constant 0 : index
    %c0_14 = arith.constant 0 : index
    %6 = vector.load %arg7[%c0_13, %c0_14] : memref<1x128xf32, #tpu.memory_space<vmem>>, vector<1x128xf32>
    %c0_15 = arith.constant 0 : index
    %c0_16 = arith.constant 0 : index
    %7 = vector.load %arg8[%c0_15, %c0_16] : memref<1x1xf32, #tpu.memory_space<vmem>>, vector<1x1xf32>
    "tpu.trace_start"() <{level = 10 : i32, message = "bsd,de->bse"}> : () -> ()
    %cst = arith.constant dense<0.000000e+00> : vector<4x4x32xf32>
    %8 = tpu.matmul %0, %3, %cst {dimension_numbers = #tpu.dot_dimension_numbers<[2], [0], [0, 1], [1], [0, 0, 0, 1, 1, 1], [], []>} : vector<4x4x64xf32>, vector<64x32xf32>, vector<4x4x32xf32> -> vector<4x4x32xf32>
    %cst_17 = arith.constant dense<0.000000e+00> : vector<4x4x32xf32>
    %9 = tpu.matmul %1, %2, %cst_17 {dimension_numbers = #tpu.dot_dimension_numbers<[2], [0], [0, 1], [1], [0, 0, 0, 1, 1, 1], [], []>} : vector<4x4x64xf32>, vector<64x32xf32>, vector<4x4x32xf32> -> vector<4x4x32xf32>
    "tpu.trace_stop"() : () -> ()
    %10 = vector.shape_cast %9 : vector<4x4x32xf32> to vector<4x1x4x32xf32>
    %11 = vector.shape_cast %8 : vector<4x4x32xf32> to vector<4x4x1x32xf32>
    %12 = vector.broadcast %10 : vector<4x1x4x32xf32> to vector<4x4x4x32xf32>
    %13 = vector.broadcast %11 : vector<4x4x1x32xf32> to vector<4x4x4x32xf32>
    %14 = arith.addf %12, %13 : vector<4x4x4x32xf32>
    %15 = vector.shape_cast %4 : vector<1x32xf32> to vector<1x1x1x32xf32>
    %16 = vector.broadcast %15 : vector<1x1x1x32xf32> to vector<4x4x4x32xf32>
    %17 = arith.addf %14, %16 : vector<4x4x4x32xf32>
    %18 = math.tanh %17 : vector<4x4x4x32xf32>
    %19 = vector.shape_cast %5 : vector<1x32xf32> to vector<1x1x1x32xf32>
    %20 = vector.broadcast %19 : vector<1x1x1x32xf32> to vector<4x4x4x32xf32>
    %21 = arith.mulf %18, %20 : vector<4x4x4x32xf32>
    %cst_18 = arith.constant dense<0.000000e+00> : vector<4x4x4xf32>
    %22 = vector.multi_reduction <add>, %21, %cst_18 [3] : vector<4x4x4x32xf32> to vector<4x4x4xf32>
    %23 = arith.mulf %0, %0 : vector<4x4x64xf32>
    %cst_19 = arith.constant dense<0.000000e+00> : vector<4x4xf32>
    %24 = vector.multi_reduction <add>, %23, %cst_19 [2] : vector<4x4x64xf32> to vector<4x4xf32>
    %25 = vector.shape_cast %24 : vector<4x4xf32> to vector<4x4x1xf32>
    %cst_20 = arith.constant 1.000000e-24 : f32
    %26 = vector.broadcast %cst_20 : f32 to vector<4x4x1xf32>
    %27 = arith.maximumf %25, %26 : vector<4x4x1xf32>
    %28 = math.rsqrt %27 : vector<4x4x1xf32>
    %29 = arith.mulf %1, %1 : vector<4x4x64xf32>
    %cst_21 = arith.constant dense<0.000000e+00> : vector<4x4xf32>
    %30 = vector.multi_reduction <add>, %29, %cst_21 [2] : vector<4x4x64xf32> to vector<4x4xf32>
    %31 = vector.shape_cast %30 : vector<4x4xf32> to vector<4x4x1xf32>
    %cst_22 = arith.constant 1.000000e-24 : f32
    %32 = vector.broadcast %cst_22 : f32 to vector<4x4x1xf32>
    %33 = arith.maximumf %31, %32 : vector<4x4x1xf32>
    %34 = math.rsqrt %33 : vector<4x4x1xf32>
    %35 = vector.broadcast %28 : vector<4x4x1xf32> to vector<4x4x64xf32>
    %36 = arith.mulf %0, %35 : vector<4x4x64xf32>
    %37 = vector.broadcast %34 : vector<4x4x1xf32> to vector<4x4x64xf32>
    %38 = arith.mulf %1, %37 : vector<4x4x64xf32>
    "tpu.trace_start"() <{level = 10 : i32, message = "bsd,btd->bst"}> : () -> ()
    %cst_23 = arith.constant dense<0.000000e+00> : vector<4x4x4xf32>
    %39 = tpu.matmul %36, %38, %cst_23 {dimension_numbers = #tpu.dot_dimension_numbers<[2], [2], [1], [1], [0, 0, 0, 1, 1, 1], [0], [0]>} : vector<4x4x64xf32>, vector<4x4x64xf32>, vector<4x4x4xf32> -> vector<4x4x4xf32>
    "tpu.trace_stop"() : () -> ()
    %40 = arith.mulf %22, %39 : vector<4x4x4xf32>
    %41 = tpu.transpose %39, [0, 2, 1] : vector<4x4x4xf32> -> vector<4x4x4xf32>
    %42 = arith.mulf %22, %41 : vector<4x4x4xf32>
    "tpu.trace_start"() <{level = 10 : i32, message = "bij,bjd->bid"}> : () -> ()
    %cst_24 = arith.constant dense<0.000000e+00> : vector<4x4x64xf32>
    %43 = tpu.matmul %40, %1, %cst_24 {dimension_numbers = #tpu.dot_dimension_numbers<[2], [1], [1], [2], [0, 0, 0, 1, 1, 2], [0], [0]>} : vector<4x4x4xf32>, vector<4x4x64xf32>, vector<4x4x64xf32> -> vector<4x4x64xf32>
    %cst_25 = arith.constant dense<0.000000e+00> : vector<4x4x64xf32>
    %44 = tpu.matmul %42, %0, %cst_25 {dimension_numbers = #tpu.dot_dimension_numbers<[2], [1], [1], [2], [0, 0, 0, 1, 1, 2], [0], [0]>} : vector<4x4x4xf32>, vector<4x4x64xf32>, vector<4x4x64xf32> -> vector<4x4x64xf32>
    "tpu.trace_stop"() : () -> ()
    %cst_26 = arith.constant dense<0.000000e+00> : vector<4x64xf32>
    %45 = vector.multi_reduction <add>, %43, %cst_26 [1] : vector<4x4x64xf32> to vector<4x64xf32>
    %cst_27 = arith.constant 0.000000e+00 : f32
    %46 = vector.broadcast %cst_27 : f32 to vector<4x64xf32>
    %47 = arith.maximumf %45, %46 : vector<4x64xf32>
    %cst_28 = arith.constant dense<0.000000e+00> : vector<4x64xf32>
    %48 = vector.multi_reduction <add>, %44, %cst_28 [1] : vector<4x4x64xf32> to vector<4x64xf32>
    %cst_29 = arith.constant 0.000000e+00 : f32
    %49 = vector.broadcast %cst_29 : f32 to vector<4x64xf32>
    %50 = arith.maximumf %48, %49 : vector<4x64xf32>
    %51 = vector.extract_strided_slice %6 {offsets = [0, 0], sizes = [1, 64], strides = [1, 1]} : vector<1x128xf32> to vector<1x64xf32>
    %52 = vector.broadcast %51 : vector<1x64xf32> to vector<4x64xf32>
    %53 = arith.mulf %47, %52 : vector<4x64xf32>
    %54 = vector.extract_strided_slice %6 {offsets = [0, 64], sizes = [1, 64], strides = [1, 1]} : vector<1x128xf32> to vector<1x64xf32>
    %55 = vector.broadcast %54 : vector<1x64xf32> to vector<4x64xf32>
    %56 = arith.mulf %50, %55 : vector<4x64xf32>
    %57 = arith.addf %53, %56 : vector<4x64xf32>
    %cst_30 = arith.constant dense<0.000000e+00> : vector<4xf32>
    %58 = vector.multi_reduction <add>, %57, %cst_30 [1] : vector<4x64xf32> to vector<4xf32>
    %59 = vector.shape_cast %58 : vector<4xf32> to vector<4x1xf32>
    %60 = vector.broadcast %7 : vector<1x1xf32> to vector<4x1xf32>
    %61 = arith.addf %59, %60 : vector<4x1xf32>
    %c0_31 = arith.constant 0 : index
    %c0_32 = arith.constant 0 : index
    %62 = vector.load %arg9[%c0_31, %c0_32] : memref<4x1xf32, #tpu.memory_space<vmem>>, vector<4x1xf32>
    tpu.vector_store %arg9[%c0_31, %c0_32], %61 {strides = array<i32>} : memref<4x1xf32, #tpu.memory_space<vmem>>, vector<4x1xf32>,
    return
  }
  func.func @transform_0(%arg0: i32) -> (i32, i32, i32) {
    %c0_i32 = arith.constant 0 : i32
    %c0_i32_0 = arith.constant 0 : i32
    %c0_i32_1 = arith.constant 0 : i32
    return %arg0, %c0_i32, %c0_i32_0 : i32, i32, i32
  }
  func.func @transform_1(%arg0: i32) -> (i32, i32, i32) {
    %c0_i32 = arith.constant 0 : i32
    %c0_i32_0 = arith.constant 0 : i32
    %c0_i32_1 = arith.constant 0 : i32
    return %arg0, %c0_i32, %c0_i32_0 : i32, i32, i32
  }
  func.func @transform_2(%arg0: i32) -> (i32, i32) {
    %c0_i32 = arith.constant 0 : i32
    %c0_i32_0 = arith.constant 0 : i32
    %c0_i32_1 = arith.constant 0 : i32
    return %c0_i32, %c0_i32_0 : i32, i32
  }
  func.func @transform_3(%arg0: i32) -> (i32, i32) {
    %c0_i32 = arith.constant 0 : i32
    %c0_i32_0 = arith.constant 0 : i32
    %c0_i32_1 = arith.constant 0 : i32
    return %c0_i32, %c0_i32_0 : i32, i32
  }
  func.func @transform_4(%arg0: i32) -> (i32, i32) {
    %c0_i32 = arith.constant 0 : i32
    %c0_i32_0 = arith.constant 0 : i32
    %c0_i32_1 = arith.constant 0 : i32
    return %c0_i32, %c0_i32_0 : i32, i32
  }
  func.func @transform_5(%arg0: i32) -> (i32, i32) {
    %c0_i32 = arith.constant 0 : i32
    %c0_i32_0 = arith.constant 0 : i32
    %c0_i32_1 = arith.constant 0 : i32
    return %c0_i32, %c0_i32_0 : i32, i32
  }
  func.func @transform_6(%arg0: i32) -> (i32, i32) {
    %c0_i32 = arith.constant 0 : i32
    %c0_i32_0 = arith.constant 0 : i32
    %c0_i32_1 = arith.constant 0 : i32
    return %c0_i32, %c0_i32_0 : i32, i32
  }
  func.func @transform_7(%arg0: i32) -> (i32, i32) {
    %c0_i32 = arith.constant 0 : i32
    %c0_i32_0 = arith.constant 0 : i32
    %c0_i32_1 = arith.constant 0 : i32
    return %c0_i32, %c0_i32_0 : i32, i32
  }
  func.func @transform_8(%arg0: i32) -> (i32, i32) {
    %c0_i32 = arith.constant 0 : i32
    %c0_i32_0 = arith.constant 0 : i32
    return %arg0, %c0_i32 : i32, i32
  }
}

</mosaic_0001>

<llo_original>
// kernel: tpu_custom_call.1
$region0: #{tpu_custom_call.1}
  #allocation0 [shape = 'u32[]', space=smem, size = 0x4, offset = 0x4, fixed_abs, tag = 'smem constant byte address 0x4 - core index']
  #allocation1 [shape = 'u32[72,128]{1,0:T(1,128)}', space=vmem, size = 0x9000, scoped, tag = 'internal scratch']
  #allocation2 [shape = 'f32[1,1]{1,0:T(1,128)S(1)}', space=vmem, size = 0x200, scoped, tag = 'scoped memory for tpu_custom_call.1']
  %s0 = inlined_call_operand.vmem [shape: f32[4,4,64], index: 0, kind: input, shape index: {}]
  %s1 = inlined_call_operand.vmem [shape: f32[4,4,64], index: 1, kind: input, shape index: {}]
  %s2 = inlined_call_operand.vmem [shape: f32[64,32], index: 2, kind: input, shape index: {}]
  %s3 = inlined_call_operand.vmem [shape: f32[64,32], index: 3, kind: input, shape index: {}]
  %s4 = inlined_call_operand.vmem [shape: f32[1,32], index: 4, kind: input, shape index: {}]
  %s5 = inlined_call_operand.vmem [shape: f32[1,32], index: 5, kind: input, shape index: {}]
  %s6 = inlined_call_operand.vmem [shape: f32[1,128], index: 6, kind: input, shape index: {}]
  %s7 = inlined_call_operand.<no memory space> [shape: f32[1,1], index: 7, kind: input, shape index: {}]
  %s8 = inlined_call_operand.vmem [shape: f32[4,1], index: 8, kind: output, shape index: {}]
  %s9 = sld [smem:[#allocation0]]
  $region42: #{tpu_custom_call.1} parent=0
    _
  %s11 = ssub.s32 1, %s9
  %s12 = scalar_select 0, %s11, %s9
  %v13 = vstv %s7
  %14 = vst [vmem:[#allocation2] sm:$0x1] %v13
  // Predicated region
  $region2: #{tpu_custom_call.1} parent=0 // pred_check
    _
  $region3: #{tpu_custom_call.1} parent=0 // pred_check_branch
    %16 = sbr.rel (0) target = $region5
  $region4: #{tpu_custom_call.1} parent=0 // pred_region
    _
  $region5: #{tpu_custom_call.1} parent=0 // pred_fallthru
    _
  // Predicated region
  $region6: #{tpu_custom_call.1} parent=0 // pred_check
    _
  $region7: #{tpu_custom_call.1} parent=0 // pred_check_branch
    %18 = sbr.rel (0) target = $region9
  $region8: #{tpu_custom_call.1} parent=0 // pred_region
    _
  $region9: #{tpu_custom_call.1} parent=0 // pred_fallthru
    _
  // Predicated region
  $region10: #{tpu_custom_call.1} parent=0 // pred_check
    _
  $region11: #{tpu_custom_call.1} parent=0 // pred_check_branch
    %20 = sbr.rel (0) target = $region13
  $region12: #{tpu_custom_call.1} parent=0 // pred_region
    _
  $region13: #{tpu_custom_call.1} parent=0 // pred_fallthru
    _
  // Predicated region
  $region14: #{tpu_custom_call.1} parent=0 // pred_check
    _
  $region15: #{tpu_custom_call.1} parent=0 // pred_check_branch
    %22 = sbr.rel (0) target = $region17
  $region16: #{tpu_custom_call.1} parent=0 // pred_region
    _
  $region17: #{tpu_custom_call.1} parent=0 // pred_fallthru
    _
  // Predicated region
  $region18: #{tpu_custom_call.1} parent=0 // pred_check
    _
  $region19: #{tpu_custom_call.1} parent=0 // pred_check_branch
    %24 = sbr.rel (0) target = $region21
  $region20: #{tpu_custom_call.1} parent=0 // pred_region
    _
  $region21: #{tpu_custom_call.1} parent=0 // pred_fallthru
    _
  // Predicated region
  $region22: #{tpu_custom_call.1} parent=0 // pred_check
    _
  $region23: #{tpu_custom_call.1} parent=0 // pred_check_branch
    %26 = sbr.rel (0) target = $region25
  $region24: #{tpu_custom_call.1} parent=0 // pred_region
    _
  $region25: #{tpu_custom_call.1} parent=0 // pred_fallthru
    _
  // Predicated region
  $region26: #{tpu_custom_call.1} parent=0 // pred_check
    _
  $region27: #{tpu_custom_call.1} parent=0 // pred_check_branch
    %28 = sbr.rel (0) target = $region29
  $region28: #{tpu_custom_call.1} parent=0 // pred_region
    _
  $region29: #{tpu_custom_call.1} parent=0 // pred_fallthru
    _
  // Predicated region
  $region30: #{tpu_custom_call.1} parent=0 // pred_check
    _
  $region31: #{tpu_custom_call.1} parent=0 // pred_check_branch
    %30 = sbr.rel (0) target = $region33
  $region32: #{tpu_custom_call.1} parent=0 // pred_region
    _
  $region33: #{tpu_custom_call.1} parent=0 // pred_fallthru
    _
  %v31 = vld [vmem:[%s0] sm:$0xf]
  %v32 = vld [vmem:[%s0 + $0x4] sm:$0xf]
  %v33 = vld [vmem:[%s0 + $0x8] sm:$0xf]
  %v34 = vld [vmem:[%s0 + $0xc] sm:$0xf]
  %v35 = vld [vmem:[%s1] sm:$0xf]
  %v36 = vld [vmem:[%s1 + $0x4] sm:$0xf]
  %v37 = vld [vmem:[%s1 + $0x8] sm:$0xf]
  %v38 = vld [vmem:[%s1 + $0xc] sm:$0xf]
  %v39 = vld [vmem:[%s2] sm:$0xff]
  %v40 = vld [vmem:[%s2 + $0x8] sm:$0xff]
  %v41 = vld [vmem:[%s2 + $0x10] sm:$0xff]
  %v42 = vld [vmem:[%s2 + $0x18] sm:$0xff]
  %v43 = vld [vmem:[%s2 + $0x20] sm:$0xff]
  %v44 = vld [vmem:[%s2 + $0x28] sm:$0xff]
  %v45 = vld [vmem:[%s2 + $0x30] sm:$0xff]
  %v46 = vld [vmem:[%s2 + $0x38] sm:$0xff]
  %v47 = vld [vmem:[%s3] sm:$0xff]
  %v48 = vld [vmem:[%s3 + $0x8] sm:$0xff]
  %v49 = vld [vmem:[%s3 + $0x10] sm:$0xff]
  %v50 = vld [vmem:[%s3 + $0x18] sm:$0xff]
  %v51 = vld [vmem:[%s3 + $0x20] sm:$0xff]
  %v52 = vld [vmem:[%s3 + $0x28] sm:$0xff]
  %v53 = vld [vmem:[%s3 + $0x30] sm:$0xff]
  %v54 = vld [vmem:[%s3 + $0x38] sm:$0xff]
  %v55 = vld [vmem:[%s4] sm:$0x1]
  %v56 = vld [vmem:[%s5] sm:$0x1]
  %v57 = vld [vmem:[%s6] sm:$0x1]
  %v58 = vld [vmem:[#allocation2] sm:$0x1]
  %63 = vst [vmem:[#allocation1] ss:$2 sm:$0xff] %v31
  %s64 = scalar_lea.vmem [#allocation1], 1
  %65 = vst [vmem:[%s64] ss:$2 sm:$0xff] %v32
  %s66 = scalar_lea.vmem [#allocation1], 16
  %67 = vst [vmem:[%s66] ss:$2 sm:$0xff] %v33
  %s68 = scalar_lea.vmem [#allocation1], 17
  %69 = vst [vmem:[%s68] ss:$2 sm:$0xff] %v34
  %v70 = vld.sshfl [vmem:[#allocation1] sm:$0xff pattern:$0x75316420]
  %v71 = vld.sshfl [vmem:[#allocation1 + $0x10] sm:$0xff pattern:$0x75316420]
  %vm72 = vcmask 523264
  %v73 = vsel %vm72, %v70, 0
  %v75 = vsel %vm72, %v71, 0
  %77 = vmatpush.msra.mxu0 0.0
  %78 = vmatpush.msra.mxu0 0.0
  %79 = vmatpush.msra.mxu0 0.0
  %80 = vmatpush.msra.mxu0 0.0
  %81 = vmatpush.msra.mxu0 0.0
  %82 = vmatpush.msra.mxu0 0.0
  %83 = vmatpush.msra.mxu0 0.0
  %84 = vmatpush.msra.mxu0 0.0
  %85 = vmatpush.msra.mxu0 %v54
  %86 = vmatpush.msra.mxu0 %v53
  %87 = vmatpush.msra.mxu0 %v52
  %88 = vmatpush.msra.mxu0 %v51
  %89 = vmatpush.msra.mxu0 %v50
  %90 = vmatpush.msra.mxu0 %v49
  %91 = vmatpush.msra.mxu0 %v48
  %92 = vmatpush.msra.mxu0 %v47
  %93 = vmatmul.f32.gmra.mxu0 %v73
  %v94 = vpop.f32.mrf.mxu0
  %v95 = vadd.f32 0.0, %v94
  %96 = vmatmul.f32.gmra.mxu0 %v75
  %v97 = vpop.f32.mrf.mxu0
  %v98 = vadd.f32 0.0, %v97
  %99 = vdwg.mxu0
  %104 = vst [vmem:[#allocation1] ss:$2 sm:$0xff] %v35
  %s105 = scalar_lea.vmem [#allocation1], 1
  %106 = vst [vmem:[%s105] ss:$2 sm:$0xff] %v36
  %s107 = scalar_lea.vmem [#allocation1], 16
  %108 = vst [vmem:[%s107] ss:$2 sm:$0xff] %v37
  %s109 = scalar_lea.vmem [#allocation1], 17
  %110 = vst [vmem:[%s109] ss:$2 sm:$0xff] %v38
  %v111 = vld.sshfl [vmem:[#allocation1] sm:$0xff pattern:$0x75316420]
  %v112 = vld.sshfl [vmem:[#allocation1 + $0x10] sm:$0xff pattern:$0x75316420]
  %v113 = vsel %vm72, %v111, 0
  %v115 = vsel %vm72, %v112, 0
  %117 = vmatpush.msra.mxu0 0.0
  %118 = vmatpush.msra.mxu0 0.0
  %119 = vmatpush.msra.mxu0 0.0
  %120 = vmatpush.msra.mxu0 0.0
  %121 = vmatpush.msra.mxu0 0.0
  %122 = vmatpush.msra.mxu0 0.0
  %123 = vmatpush.msra.mxu0 0.0
  %124 = vmatpush.msra.mxu0 0.0
  %125 = vmatpush.msra.mxu0 %v46
  %126 = vmatpush.msra.mxu0 %v45
  %127 = vmatpush.msra.mxu0 %v44
  %128 = vmatpush.msra.mxu0 %v43
  %129 = vmatpush.msra.mxu0 %v42
  %130 = vmatpush.msra.mxu0 %v41
  %131 = vmatpush.msra.mxu0 %v40
  %132 = vmatpush.msra.mxu0 %v39
  %133 = vmatmul.f32.gmra.mxu0 %v113
  %v134 = vpop.f32.mrf.mxu0
  %v135 = vadd.f32 0.0, %v134
  %136 = vmatmul.f32.gmra.mxu0 %v115
  %v137 = vpop.f32.mrf.mxu0
  %v138 = vadd.f32 0.0, %v137
  %139 = vdwg.mxu0
  %v142 = vrot.slane %v135, 4
  %v143 = vrot.slane %v138, 4
  %v148 = vrot.slane %v95, 1
  %v149 = vrot.slane %v95, 2
  %v150 = vrot.slane %v95, 3
  %v151 = vrot.slane %v95, 4
  %v152 = vrot.slane %v95, 5
  %v153 = vrot.slane %v95, 6
  %v154 = vrot.slane %v95, 7
  %v155 = vrot.slane %v98, 1
  %v156 = vrot.slane %v98, 2
  %v157 = vrot.slane %v98, 3
  %v158 = vrot.slane %v98, 4
  %v159 = vrot.slane %v98, 5
  %v160 = vrot.slane %v98, 6
  %v161 = vrot.slane %v98, 7
  %v162 = vperm.slane %v95, 0
  %v163 = vperm.slane %v148, 0
  %v164 = vperm.slane %v149, 0
  %v165 = vperm.slane %v150, 0
  %v166 = vperm.slane %v151, 0
  %v167 = vperm.slane %v152, 0
  %v168 = vperm.slane %v153, 0
  %v169 = vperm.slane %v154, 0
  %v170 = vperm.slane %v98, 0
  %v171 = vperm.slane %v155, 0
  %v172 = vperm.slane %v156, 0
  %v173 = vperm.slane %v157, 0
  %v174 = vperm.slane %v158, 0
  %v175 = vperm.slane %v159, 0
  %v176 = vperm.slane %v160, 0
  %v177 = vperm.slane %v161, 0
  %v194 = vadd.f32 %v135, %v162
  %v195 = vadd.f32 %v135, %v163
  %v196 = vadd.f32 %v135, %v164
  %v197 = vadd.f32 %v135, %v165
  %v198 = vadd.f32 %v142, %v166
  %v199 = vadd.f32 %v142, %v167
  %v200 = vadd.f32 %v142, %v168
  %v201 = vadd.f32 %v142, %v169
  %v202 = vadd.f32 %v138, %v170
  %v203 = vadd.f32 %v138, %v171
  %v204 = vadd.f32 %v138, %v172
  %v205 = vadd.f32 %v138, %v173
  %v206 = vadd.f32 %v143, %v174
  %v207 = vadd.f32 %v143, %v175
  %v208 = vadd.f32 %v143, %v176
  %v209 = vadd.f32 %v143, %v177
  %v211 = vperm.slane %v55, 0
  %v213 = vadd.f32 %v194, %v211
  %v214 = vadd.f32 %v195, %v211
  %v215 = vadd.f32 %v196, %v211
  %v216 = vadd.f32 %v197, %v211
  %v217 = vadd.f32 %v198, %v211
  %v218 = vadd.f32 %v199, %v211
  %v219 = vadd.f32 %v200, %v211
  %v220 = vadd.f32 %v201, %v211
  %v221 = vadd.f32 %v202, %v211
  %v222 = vadd.f32 %v203, %v211
  %v223 = vadd.f32 %v204, %v211
  %v224 = vadd.f32 %v205, %v211
  %v225 = vadd.f32 %v206, %v211
  %v226 = vadd.f32 %v207, %v211
  %v227 = vadd.f32 %v208, %v211
  %v228 = vadd.f32 %v209, %v211
  %v229 = vtanh.pop %v213
  %v230 = vtanh.pop %v214
  %v231 = vtanh.pop %v215
  %v232 = vtanh.pop %v216
  %v233 = vtanh.pop %v217
  %v234 = vtanh.pop %v218
  %v235 = vtanh.pop %v219
  %v236 = vtanh.pop %v220
  %v237 = vtanh.pop %v221
  %v238 = vtanh.pop %v222
  %v239 = vtanh.pop %v223
  %v240 = vtanh.pop %v224
  %v241 = vtanh.pop %v225
  %v242 = vtanh.pop %v226
  %v243 = vtanh.pop %v227
  %v244 = vtanh.pop %v228
  %v246 = vperm.slane %v56, 0
  %v248 = vmul.f32 %v229, %v246
  %v249 = vmul.f32 %v230, %v246
  %v250 = vmul.f32 %v231, %v246
  %v251 = vmul.f32 %v232, %v246
  %v252 = vmul.f32 %v233, %v246
  %v253 = vmul.f32 %v234, %v246
  %v254 = vmul.f32 %v235, %v246
  %v255 = vmul.f32 %v236, %v246
  %v256 = vmul.f32 %v237, %v246
  %v257 = vmul.f32 %v238, %v246
  %v258 = vmul.f32 %v239, %v246
  %v259 = vmul.f32 %v240, %v246
  %v260 = vmul.f32 %v241, %v246
  %v261 = vmul.f32 %v242, %v246
  %v262 = vmul.f32 %v243, %v246
  %v263 = vmul.f32 %v244, %v246
  %vm264 = vcmask 257024
  %v265 = vsel %vm264, %v248, 0.0
  %266 = vadd.xlane.f32.xlu0 %v265
  %v267 = vpop.xlane.xlu0 %266
  %v268 = vsel %vm264, %v249, 0.0
  %269 = vadd.xlane.f32.xlu0 %v268
  %v270 = vpop.xlane.xlu0 %269
  %v271 = vsel %vm264, %v250, 0.0
  %272 = vadd.xlane.f32.xlu0 %v271
  %v273 = vpop.xlane.xlu0 %272
  %v274 = vsel %vm264, %v251, 0.0
  %275 = vadd.xlane.f32.xlu0 %v274
  %v276 = vpop.xlane.xlu0 %275
  %v277 = vsel %vm264, %v252, 0.0
  %278 = vadd.xlane.f32.xlu0 %v277
  %v279 = vpop.xlane.xlu0 %278
  %v280 = vsel %vm264, %v253, 0.0
  %281 = vadd.xlane.f32.xlu0 %v280
  %v282 = vpop.xlane.xlu0 %281
  %v283 = vsel %vm264, %v254, 0.0
  %284 = vadd.xlane.f32.xlu0 %v283
  %v285 = vpop.xlane.xlu0 %284
  %v286 = vsel %vm264, %v255, 0.0
  %287 = vadd.xlane.f32.xlu0 %v286
  %v288 = vpop.xlane.xlu0 %287
  %v289 = vsel %vm264, %v256, 0.0
  %290 = vadd.xlane.f32.xlu0 %v289
  %v291 = vpop.xlane.xlu0 %290
  %v292 = vsel %vm264, %v257, 0.0
  %293 = vadd.xlane.f32.xlu0 %v292
  %v294 = vpop.xlane.xlu0 %293
  %v295 = vsel %vm264, %v258, 0.0
  %296 = vadd.xlane.f32.xlu0 %v295
  %v297 = vpop.xlane.xlu0 %296
  %v298 = vsel %vm264, %v259, 0.0
  %299 = vadd.xlane.f32.xlu0 %v298
  %v300 = vpop.xlane.xlu0 %299
  %v301 = vsel %vm264, %v260, 0.0
  %302 = vadd.xlane.f32.xlu0 %v301
  %v303 = vpop.xlane.xlu0 %302
  %v304 = vsel %vm264, %v261, 0.0
  %305 = vadd.xlane.f32.xlu0 %v304
  %v306 = vpop.xlane.xlu0 %305
  %v307 = vsel %vm264, %v262, 0.0
  %308 = vadd.xlane.f32.xlu0 %v307
  %v309 = vpop.xlane.xlu0 %308
  %v310 = vsel %vm264, %v263, 0.0
  %311 = vadd.xlane.f32.xlu0 %v310
  %v312 = vpop.xlane.xlu0 %311
  %v313 = vmul.f32 %v31, %v31
  %v314 = vmul.f32 %v32, %v32
  %v315 = vmul.f32 %v33, %v33
  %v316 = vmul.f32 %v34, %v34
  %vm317 = vcmask 519168
  %v318 = vsel %vm317, %v313, 0.0
  %319 = vadd.xlane.f32.xlu0 %v318
  %v320 = vpop.xlane.xlu0 %319
  %v321 = vsel %vm317, %v314, 0.0
  %322 = vadd.xlane.f32.xlu0 %v321
  %v323 = vpop.xlane.xlu0 %322
  %v324 = vsel %vm317, %v315, 0.0
  %325 = vadd.xlane.f32.xlu0 %v324
  %v326 = vpop.xlane.xlu0 %325
  %v327 = vsel %vm317, %v316, 0.0
  %328 = vadd.xlane.f32.xlu0 %v327
  %v329 = vpop.xlane.xlu0 %328
  %v330 = vmax.f32 %v320, 1e-24
  %v331 = vmax.f32 %v323, 1e-24
  %v332 = vmax.f32 %v326, 1e-24
  %v333 = vmax.f32 %v329, 1e-24
  %v334 = vrsqrt.pop %v330
  %v335 = vmul.f32 %v334, %v330
  %v336 = vmul.f32 %v335, %v334
  %v337 = vmul.f32 0.5, %v336
  %v338 = vsub.f32 1.5, %v337
  %v339 = vmul.f32 %v334, %v338
  %vm340 = vweird.f32 %v330
  %vm341 = vweird.f32 %v334
  %vm342 = vmor %vm340, %vm341
  %v343 = vsel %vm342, %v334, %v339
  %v344 = vrsqrt.pop %v331
  %v345 = vmul.f32 %v344, %v331
  %v346 = vmul.f32 %v345, %v344
  %v347 = vmul.f32 0.5, %v346
  %v348 = vsub.f32 1.5, %v347
  %v349 = vmul.f32 %v344, %v348
  %vm350 = vweird.f32 %v331
  %vm351 = vweird.f32 %v344
  %vm352 = vmor %vm350, %vm351
  %v353 = vsel %vm352, %v344, %v349
  %v354 = vrsqrt.pop %v332
  %v355 = vmul.f32 %v354, %v332
  %v356 = vmul.f32 %v355, %v354
  %v357 = vmul.f32 0.5, %v356
  %v358 = vsub.f32 1.5, %v357
  %v359 = vmul.f32 %v354, %v358
  %vm360 = vweird.f32 %v332
  %vm361 = vweird.f32 %v354
  %vm362 = vmor %vm360, %vm361
  %v363 = vsel %vm362, %v354, %v359
  %v364 = vrsqrt.pop %v333
  %v365 = vmul.f32 %v364, %v333
  %v366 = vmul.f32 %v365, %v364
  %v367 = vmul.f32 0.5, %v366
  %v368 = vsub.f32 1.5, %v367
  %v369 = vmul.f32 %v364, %v368
  %vm370 = vweird.f32 %v333
  %vm371 = vweird.f32 %v364
  %vm372 = vmor %vm370, %vm371
  %v373 = vsel %vm372, %v364, %v369
  %v374 = vmul.f32 %v35, %v35
  %v375 = vmul.f32 %v36, %v36
  %v376 = vmul.f32 %v37, %v37
  %v377 = vmul.f32 %v38, %v38
  %v378 = vsel %vm317, %v374, 0.0
  %379 = vadd.xlane.f32.xlu0 %v378
  %v380 = vpop.xlane.xlu0 %379
  %v381 = vsel %vm317, %v375, 0.0
  %382 = vadd.xlane.f32.xlu0 %v381
  %v383 = vpop.xlane.xlu0 %382
  %v384 = vsel %vm317, %v376, 0.0
  %385 = vadd.xlane.f32.xlu0 %v384
  %v386 = vpop.xlane.xlu0 %385
  %v387 = vsel %vm317, %v377, 0.0
  %388 = vadd.xlane.f32.xlu0 %v387
  %v389 = vpop.xlane.xlu0 %388
  %v390 = vmax.f32 %v380, 1e-24
  %v391 = vmax.f32 %v383, 1e-24
  %v392 = vmax.f32 %v386, 1e-24
  %v393 = vmax.f32 %v389, 1e-24
  %v394 = vrsqrt.pop %v390
  %v395 = vmul.f32 %v394, %v390
  %v396 = vmul.f32 %v395, %v394
  %v397 = vmul.f32 0.5, %v396
  %v398 = vsub.f32 1.5, %v397
  %v399 = vmul.f32 %v394, %v398
  %vm400 = vweird.f32 %v390
  %vm401 = vweird.f32 %v394
  %vm402 = vmor %vm400, %vm401
  %v403 = vsel %vm402, %v394, %v399
  %v404 = vrsqrt.pop %v391
  %v405 = vmul.f32 %v404, %v391
  %v406 = vmul.f32 %v405, %v404
  %v407 = vmul.f32 0.5, %v406
  %v408 = vsub.f32 1.5, %v407
  %v409 = vmul.f32 %v404, %v408
  %vm410 = vweird.f32 %v391
  %vm411 = vweird.f32 %v404
  %vm412 = vmor %vm410, %vm411
  %v413 = vsel %vm412, %v404, %v409
  %v414 = vrsqrt.pop %v392
  %v415 = vmul.f32 %v414, %v392
  %v416 = vmul.f32 %v415, %v414
  %v417 = vmul.f32 0.5, %v416
  %v418 = vsub.f32 1.5, %v417
  %v419 = vmul.f32 %v414, %v418
  %vm420 = vweird.f32 %v392
  %vm421 = vweird.f32 %v414
  %vm422 = vmor %vm420, %vm421
  %v423 = vsel %vm422, %v414, %v419
  %v424 = vrsqrt.pop %v393
  %v425 = vmul.f32 %v424, %v393
  %v426 = vmul.f32 %v425, %v424
  %v427 = vmul.f32 0.5, %v426
  %v428 = vsub.f32 1.5, %v427
  %v429 = vmul.f32 %v424, %v428
  %vm430 = vweird.f32 %v393
  %vm431 = vweird.f32 %v424
  %vm432 = vmor %vm430, %vm431
  %v433 = vsel %vm432, %v424, %v429
  %v434 = vmul.f32 %v31, %v343
  %v435 = vmul.f32 %v32, %v353
  %v436 = vmul.f32 %v33, %v363
  %v437 = vmul.f32 %v34, %v373
  %v438 = vmul.f32 %v35, %v403
  %v439 = vmul.f32 %v36, %v413
  %v440 = vmul.f32 %v37, %v423
  %v441 = vmul.f32 %v38, %v433
  %v443 = vsel %vm72, %v434, 0
  %v446 = vsel %vm72, %v438, 0
  %448 = vmatpush.xpose.msra.mxu0 0.0
  %449 = vmatpush.xpose.msra.mxu0 0.0
  %450 = vmatpush.xpose.msra.mxu0 0.0
  %451 = vmatpush.xpose.msra.mxu0 0.0
  %452 = vmatpush.xpose.msra.mxu0 0.0
  %453 = vmatpush.xpose.msra.mxu0 0.0
  %454 = vmatpush.xpose.msra.mxu0 0.0
  %455 = vmatpush.xpose.msra.mxu0 0.0
  %456 = vmatpush.xpose.msra.mxu0 0.0
  %457 = vmatpush.xpose.msra.mxu0 0.0
  %458 = vmatpush.xpose.msra.mxu0 0.0
  %459 = vmatpush.xpose.msra.mxu0 0.0
  %460 = vmatpush.xpose.msra.mxu0 0.0
  %461 = vmatpush.xpose.msra.mxu0 0.0
  %462 = vmatpush.xpose.msra.mxu0 0.0
  %463 = vmatpush.xpose.msra.mxu0 %v446
  %464 = vmatmul.f32.gmra.mxu0 %v443
  %v465 = vpop.f32.mrf.mxu0
  %v466 = vadd.f32 0.0, %v465
  %467 = vdwg.mxu0
  %v469 = vsel %vm72, %v435, 0
  %v472 = vsel %vm72, %v439, 0
  %474 = vmatpush.xpose.msra.mxu0 0.0
  %475 = vmatpush.xpose.msra.mxu0 0.0
  %476 = vmatpush.xpose.msra.mxu0 0.0
  %477 = vmatpush.xpose.msra.mxu0 0.0
  %478 = vmatpush.xpose.msra.mxu0 0.0
  %479 = vmatpush.xpose.msra.mxu0 0.0
  %480 = vmatpush.xpose.msra.mxu0 0.0
  %481 = vmatpush.xpose.msra.mxu0 0.0
  %482 = vmatpush.xpose.msra.mxu0 0.0
  %483 = vmatpush.xpose.msra.mxu0 0.0
  %484 = vmatpush.xpose.msra.mxu0 0.0
  %485 = vmatpush.xpose.msra.mxu0 0.0
  %486 = vmatpush.xpose.msra.mxu0 0.0
  %487 = vmatpush.xpose.msra.mxu0 0.0
  %488 = vmatpush.xpose.msra.mxu0 0.0
  %489 = vmatpush.xpose.msra.mxu0 %v472
  %490 = vmatmul.f32.gmra.mxu0 %v469
  %v491 = vpop.f32.mrf.mxu0
  %v492 = vadd.f32 0.0, %v491
  %493 = vdwg.mxu0
  %v495 = vsel %vm72, %v436, 0
  %v498 = vsel %vm72, %v440, 0
  %500 = vmatpush.xpose.msra.mxu0 0.0
  %501 = vmatpush.xpose.msra.mxu0 0.0
  %502 = vmatpush.xpose.msra.mxu0 0.0
  %503 = vmatpush.xpose.msra.mxu0 0.0
  %504 = vmatpush.xpose.msra.mxu0 0.0
  %505 = vmatpush.xpose.msra.mxu0 0.0
  %506 = vmatpush.xpose.msra.mxu0 0.0
  %507 = vmatpush.xpose.msra.mxu0 0.0
  %508 = vmatpush.xpose.msra.mxu0 0.0
  %509 = vmatpush.xpose.msra.mxu0 0.0
  %510 = vmatpush.xpose.msra.mxu0 0.0
  %511 = vmatpush.xpose.msra.mxu0 0.0
  %512 = vmatpush.xpose.msra.mxu0 0.0
  %513 = vmatpush.xpose.msra.mxu0 0.0
  %514 = vmatpush.xpose.msra.mxu0 0.0
  %515 = vmatpush.xpose.msra.mxu0 %v498
  %516 = vmatmul.f32.gmra.mxu0 %v495
  %v517 = vpop.f32.mrf.mxu0
  %v518 = vadd.f32 0.0, %v517
  %519 = vdwg.mxu0
  %v521 = vsel %vm72, %v437, 0
  %v524 = vsel %vm72, %v441, 0
  %526 = vmatpush.xpose.msra.mxu0 0.0
  %527 = vmatpush.xpose.msra.mxu0 0.0
  %528 = vmatpush.xpose.msra.mxu0 0.0
  %529 = vmatpush.xpose.msra.mxu0 0.0
  %530 = vmatpush.xpose.msra.mxu0 0.0
  %531 = vmatpush.xpose.msra.mxu0 0.0
  %532 = vmatpush.xpose.msra.mxu0 0.0
  %533 = vmatpush.xpose.msra.mxu0 0.0
  %534 = vmatpush.xpose.msra.mxu0 0.0
  %535 = vmatpush.xpose.msra.mxu0 0.0
  %536 = vmatpush.xpose.msra.mxu0 0.0
  %537 = vmatpush.xpose.msra.mxu0 0.0
  %538 = vmatpush.xpose.msra.mxu0 0.0
  %539 = vmatpush.xpose.msra.mxu0 0.0
  %540 = vmatpush.xpose.msra.mxu0 0.0
  %541 = vmatpush.xpose.msra.mxu0 %v524
  %542 = vmatmul.f32.gmra.mxu0 %v521
  %v543 = vpop.f32.mrf.mxu0
  %v544 = vadd.f32 0.0, %v543
  %545 = vdwg.mxu0
  %v550 = vperm.slane %v466, 0
  %v551 = vlaneseq
  %v552 = vshrl.u32 %v551, 7
  %554 = vset.pattern.permute.xlu0 %v552
  %555 = vperm.xlu0 %554, %v550
  %v556 = vpop.permute.xlu0 %555
  %v557 = vperm.slane %v466, 1
  %v558 = vlaneseq
  %v559 = vshrl.u32 %v558, 7
  %561 = vset.pattern.permute.xlu0 %v559
  %562 = vperm.xlu0 %561, %v557
  %v563 = vpop.permute.xlu0 %562
  %v564 = vperm.slane %v466, 2
  %v565 = vlaneseq
  %v566 = vshrl.u32 %v565, 7
  %568 = vset.pattern.permute.xlu0 %v566
  %569 = vperm.xlu0 %568, %v564
  %v570 = vpop.permute.xlu0 %569
  %v571 = vperm.slane %v466, 3
  %v572 = vlaneseq
  %v573 = vshrl.u32 %v572, 7
  %575 = vset.pattern.permute.xlu0 %v573
  %576 = vperm.xlu0 %575, %v571
  %v577 = vpop.permute.xlu0 %576
  %v578 = vperm.slane %v492, 0
  %v579 = vlaneseq
  %v580 = vshrl.u32 %v579, 7
  %582 = vset.pattern.permute.xlu0 %v580
  %583 = vperm.xlu0 %582, %v578
  %v584 = vpop.permute.xlu0 %583
  %v585 = vperm.slane %v492, 1
  %v586 = vlaneseq
  %v587 = vshrl.u32 %v586, 7
  %589 = vset.pattern.permute.xlu0 %v587
  %590 = vperm.xlu0 %589, %v585
  %v591 = vpop.permute.xlu0 %590
  %v592 = vperm.slane %v492, 2
  %v593 = vlaneseq
  %v594 = vshrl.u32 %v593, 7
  %596 = vset.pattern.permute.xlu0 %v594
  %597 = vperm.xlu0 %596, %v592
  %v598 = vpop.permute.xlu0 %597
  %v599 = vperm.slane %v492, 3
  %v600 = vlaneseq
  %v601 = vshrl.u32 %v600, 7
  %603 = vset.pattern.permute.xlu0 %v601
  %604 = vperm.xlu0 %603, %v599
  %v605 = vpop.permute.xlu0 %604
  %v606 = vperm.slane %v518, 0
  %v607 = vlaneseq
  %v608 = vshrl.u32 %v607, 7
  %610 = vset.pattern.permute.xlu0 %v608
  %611 = vperm.xlu0 %610, %v606
  %v612 = vpop.permute.xlu0 %611
  %v613 = vperm.slane %v518, 1
  %v614 = vlaneseq
  %v615 = vshrl.u32 %v614, 7
  %617 = vset.pattern.permute.xlu0 %v615
  %618 = vperm.xlu0 %617, %v613
  %v619 = vpop.permute.xlu0 %618
  %v620 = vperm.slane %v518, 2
  %v621 = vlaneseq
  %v622 = vshrl.u32 %v621, 7
  %624 = vset.pattern.permute.xlu0 %v622
  %625 = vperm.xlu0 %624, %v620
  %v626 = vpop.permute.xlu0 %625
  %v627 = vperm.slane %v518, 3
  %v628 = vlaneseq
  %v629 = vshrl.u32 %v628, 7
  %631 = vset.pattern.permute.xlu0 %v629
  %632 = vperm.xlu0 %631, %v627
  %v633 = vpop.permute.xlu0 %632
  %v634 = vperm.slane %v544, 0
  %v635 = vlaneseq
  %v636 = vshrl.u32 %v635, 7
  %638 = vset.pattern.permute.xlu0 %v636
  %639 = vperm.xlu0 %638, %v634
  %v640 = vpop.permute.xlu0 %639
  %v641 = vperm.slane %v544, 1
  %v642 = vlaneseq
  %v643 = vshrl.u32 %v642, 7
  %645 = vset.pattern.permute.xlu0 %v643
  %646 = vperm.xlu0 %645, %v641
  %v647 = vpop.permute.xlu0 %646
  %v648 = vperm.slane %v544, 2
  %v649 = vlaneseq
  %v650 = vshrl.u32 %v649, 7
  %652 = vset.pattern.permute.xlu0 %v650
  %653 = vperm.xlu0 %652, %v648
  %v654 = vpop.permute.xlu0 %653
  %v655 = vperm.slane %v544, 3
  %v656 = vlaneseq
  %v657 = vshrl.u32 %v656, 7
  %659 = vset.pattern.permute.xlu0 %v657
  %660 = vperm.xlu0 %659, %v655
  %v661 = vpop.permute.xlu0 %660
  %v678 = vmul.f32 %v267, %v556
  %v679 = vmul.f32 %v270, %v563
  %v680 = vmul.f32 %v273, %v570
  %v681 = vmul.f32 %v276, %v577
  %v682 = vmul.f32 %v279, %v584
  %v683 = vmul.f32 %v282, %v591
  %v684 = vmul.f32 %v285, %v598
  %v685 = vmul.f32 %v288, %v605
  %v686 = vmul.f32 %v291, %v612
  %v687 = vmul.f32 %v294, %v619
  %v688 = vmul.f32 %v297, %v626
  %v689 = vmul.f32 %v300, %v633
  %v690 = vmul.f32 %v303, %v640
  %v691 = vmul.f32 %v306, %v647
  %v692 = vmul.f32 %v309, %v654
  %v693 = vmul.f32 %v312, %v661
  %694 = vxpose.xlu0.b32.start [1/16] %v466, 128
  %695 = vxpose.xlu0.b32.cont [2/16] 0.0, 128
  %696 = vxpose.xlu0.b32.cont [3/16] 0.0, 128
  %697 = vxpose.xlu0.b32.cont [4/16] 0.0, 128
  %698 = vxpose.xlu0.b32.cont [5/16] 0.0, 128
  %699 = vxpose.xlu0.b32.cont [6/16] 0.0, 128
  %700 = vxpose.xlu0.b32.cont [7/16] 0.0, 128
  %701 = vxpose.xlu0.b32.cont [8/16] 0.0, 128
  %702 = vxpose.xlu0.b32.cont [9/16] 0.0, 128
  %703 = vxpose.xlu0.b32.cont [10/16] 0.0, 128
  %704 = vxpose.xlu0.b32.cont [11/16] 0.0, 128
  %705 = vxpose.xlu0.b32.cont [12/16] 0.0, 128
  %706 = vxpose.xlu0.b32.cont [13/16] 0.0, 128
  %707 = vxpose.xlu0.b32.cont [14/16] 0.0, 128
  %708 = vxpose.xlu0.b32.cont [15/16] 0.0, 128
  %709 = vxpose.xlu0.b32.end [16/16] 0.0, 128
  %v710 = vpop.trf.xlu0
  %v711 = vpop.trf.xlu0
  %v712 = vpop.trf.xlu0
  %v713 = vpop.trf.xlu0
  %v714 = vpop.trf.xlu0
  %v715 = vpop.trf.xlu0
  %v716 = vpop.trf.xlu0
  %v717 = vpop.trf.xlu0
  %v718 = vpop.trf.xlu0
  %v719 = vpop.trf.xlu0
  %v720 = vpop.trf.xlu0
  %v721 = vpop.trf.xlu0
  %v722 = vpop.trf.xlu0
  %v723 = vpop.trf.xlu0
  %v724 = vpop.trf.xlu0
  %v725 = vpop.trf.xlu0
  %726 = vxpose.xlu0.b32.start [1/16] %v492, 128
  %727 = vxpose.xlu0.b32.cont [2/16] 0.0, 128
  %728 = vxpose.xlu0.b32.cont [3/16] 0.0, 128
  %729 = vxpose.xlu0.b32.cont [4/16] 0.0, 128
  %730 = vxpose.xlu0.b32.cont [5/16] 0.0, 128
  %731 = vxpose.xlu0.b32.cont [6/16] 0.0, 128
  %732 = vxpose.xlu0.b32.cont [7/16] 0.0, 128
  %733 = vxpose.xlu0.b32.cont [8/16] 0.0, 128
  %734 = vxpose.xlu0.b32.cont [9/16] 0.0, 128
  %735 = vxpose.xlu0.b32.cont [10/16] 0.0, 128
  %736 = vxpose.xlu0.b32.cont [11/16] 0.0, 128
  %737 = vxpose.xlu0.b32.cont [12/16] 0.0, 128
  %738 = vxpose.xlu0.b32.cont [13/16] 0.0, 128
  %739 = vxpose.xlu0.b32.cont [14/16] 0.0, 128
  %740 = vxpose.xlu0.b32.cont [15/16] 0.0, 128
  %741 = vxpose.xlu0.b32.end [16/16] 0.0, 128
  %v742 = vpop.trf.xlu0
  %v743 = vpop.trf.xlu0
  %v744 = vpop.trf.xlu0
  %v745 = vpop.trf.xlu0
  %v746 = vpop.trf.xlu0
  %v747 = vpop.trf.xlu0
  %v748 = vpop.trf.xlu0
  %v749 = vpop.trf.xlu0
  %v750 = vpop.trf.xlu0
  %v751 = vpop.trf.xlu0
  %v752 = vpop.trf.xlu0
  %v753 = vpop.trf.xlu0
  %v754 = vpop.trf.xlu0
  %v755 = vpop.trf.xlu0
  %v756 = vpop.trf.xlu0
  %v757 = vpop.trf.xlu0
  %758 = vxpose.xlu0.b32.start [1/16] %v518, 128
  %759 = vxpose.xlu0.b32.cont [2/16] 0.0, 128
  %760 = vxpose.xlu0.b32.cont [3/16] 0.0, 128
  %761 = vxpose.xlu0.b32.cont [4/16] 0.0, 128
  %762 = vxpose.xlu0.b32.cont [5/16] 0.0, 128
  %763 = vxpose.xlu0.b32.cont [6/16] 0.0, 128
  %764 = vxpose.xlu0.b32.cont [7/16] 0.0, 128
  %765 = vxpose.xlu0.b32.cont [8/16] 0.0, 128
  %766 = vxpose.xlu0.b32.cont [9/16] 0.0, 128
  %767 = vxpose.xlu0.b32.cont [10/16] 0.0, 128
  %768 = vxpose.xlu0.b32.cont [11/16] 0.0, 128
  %769 = vxpose.xlu0.b32.cont [12/16] 0.0, 128
  %770 = vxpose.xlu0.b32.cont [13/16] 0.0, 128
  %771 = vxpose.xlu0.b32.cont [14/16] 0.0, 128
  %772 = vxpose.xlu0.b32.cont [15/16] 0.0, 128
  %773 = vxpose.xlu0.b32.end [16/16] 0.0, 128
  %v774 = vpop.trf.xlu0
  %v775 = vpop.trf.xlu0
  %v776 = vpop.trf.xlu0
  %v777 = vpop.trf.xlu0
  %v778 = vpop.trf.xlu0
  %v779 = vpop.trf.xlu0
  %v780 = vpop.trf.xlu0
  %v781 = vpop.trf.xlu0
  %v782 = vpop.trf.xlu0
  %v783 = vpop.trf.xlu0
  %v784 = vpop.trf.xlu0
  %v785 = vpop.trf.xlu0
  %v786 = vpop.trf.xlu0
  %v787 = vpop.trf.xlu0
  %v788 = vpop.trf.xlu0
  %v789 = vpop.trf.xlu0
  %790 = vxpose.xlu0.b32.start [1/16] %v544, 128
  %791 = vxpose.xlu0.b32.cont [2/16] 0.0, 128
  %792 = vxpose.xlu0.b32.cont [3/16] 0.0, 128
  %793 = vxpose.xlu0.b32.cont [4/16] 0.0, 128
  %794 = vxpose.xlu0.b32.cont [5/16] 0.0, 128
  %795 = vxpose.xlu0.b32.cont [6/16] 0.0, 128
  %796 = vxpose.xlu0.b32.cont [7/16] 0.0, 128
  %797 = vxpose.xlu0.b32.cont [8/16] 0.0, 128
  %798 = vxpose.xlu0.b32.cont [9/16] 0.0, 128
  %799 = vxpose.xlu0.b32.cont [10/16] 0.0, 128
  %800 = vxpose.xlu0.b32.cont [11/16] 0.0, 128
  %801 = vxpose.xlu0.b32.cont [12/16] 0.0, 128
  %802 = vxpose.xlu0.b32.cont [13/16] 0.0, 128
  %803 = vxpose.xlu0.b32.cont [14/16] 0.0, 128
  %804 = vxpose.xlu0.b32.cont [15/16] 0.0, 128
  %805 = vxpose.xlu0.b32.end [16/16] 0.0, 128
  %v806 = vpop.trf.xlu0
  %v807 = vpop.trf.xlu0
  %v808 = vpop.trf.xlu0
  %v809 = vpop.trf.xlu0
  %v810 = vpop.trf.xlu0
  %v811 = vpop.trf.xlu0
  %v812 = vpop.trf.xlu0
  %v813 = vpop.trf.xlu0
  %v814 = vpop.trf.xlu0
  %v815 = vpop.trf.xlu0
  %v816 = vpop.trf.xlu0
  %v817 = vpop.trf.xlu0
  %v818 = vpop.trf.xlu0
  %v819 = vpop.trf.xlu0
  %v820 = vpop.trf.xlu0
  %v821 = vpop.trf.xlu0
  %v826 = vperm.slane %v710, 0
  %v827 = vlaneseq
  %v828 = vshrl.u32 %v827, 7
  %830 = vset.pattern.permute.xlu0 %v828
  %831 = vperm.xlu0 %830, %v826
  %v832 = vpop.permute.xlu0 %831
  %v833 = vperm.slane %v710, 1
  %v834 = vlaneseq
  %v835 = vshrl.u32 %v834, 7
  %837 = vset.pattern.permute.xlu0 %v835
  %838 = vperm.xlu0 %837, %v833
  %v839 = vpop.permute.xlu0 %838
  %v840 = vperm.slane %v710, 2
  %v841 = vlaneseq
  %v842 = vshrl.u32 %v841, 7
  %844 = vset.pattern.permute.xlu0 %v842
  %845 = vperm.xlu0 %844, %v840
  %v846 = vpop.permute.xlu0 %845
  %v847 = vperm.slane %v710, 3
  %v848 = vlaneseq
  %v849 = vshrl.u32 %v848, 7
  %851 = vset.pattern.permute.xlu0 %v849
  %852 = vperm.xlu0 %851, %v847
  %v853 = vpop.permute.xlu0 %852
  %v854 = vperm.slane %v742, 0
  %v855 = vlaneseq
  %v856 = vshrl.u32 %v855, 7
  %858 = vset.pattern.permute.xlu0 %v856
  %859 = vperm.xlu0 %858, %v854
  %v860 = vpop.permute.xlu0 %859
  %v861 = vperm.slane %v742, 1
  %v862 = vlaneseq
  %v863 = vshrl.u32 %v862, 7
  %865 = vset.pattern.permute.xlu0 %v863
  %866 = vperm.xlu0 %865, %v861
  %v867 = vpop.permute.xlu0 %866
  %v868 = vperm.slane %v742, 2
  %v869 = vlaneseq
  %v870 = vshrl.u32 %v869, 7
  %872 = vset.pattern.permute.xlu0 %v870
  %873 = vperm.xlu0 %872, %v868
  %v874 = vpop.permute.xlu0 %873
  %v875 = vperm.slane %v742, 3
  %v876 = vlaneseq
  %v877 = vshrl.u32 %v876, 7
  %879 = vset.pattern.permute.xlu0 %v877
  %880 = vperm.xlu0 %879, %v875
  %v881 = vpop.permute.xlu0 %880
  %v882 = vperm.slane %v774, 0
  %v883 = vlaneseq
  %v884 = vshrl.u32 %v883, 7
  %886 = vset.pattern.permute.xlu0 %v884
  %887 = vperm.xlu0 %886, %v882
  %v888 = vpop.permute.xlu0 %887
  %v889 = vperm.slane %v774, 1
  %v890 = vlaneseq
  %v891 = vshrl.u32 %v890, 7
  %893 = vset.pattern.permute.xlu0 %v891
  %894 = vperm.xlu0 %893, %v889
  %v895 = vpop.permute.xlu0 %894
  %v896 = vperm.slane %v774, 2
  %v897 = vlaneseq
  %v898 = vshrl.u32 %v897, 7
  %900 = vset.pattern.permute.xlu0 %v898
  %901 = vperm.xlu0 %900, %v896
  %v902 = vpop.permute.xlu0 %901
  %v903 = vperm.slane %v774, 3
  %v904 = vlaneseq
  %v905 = vshrl.u32 %v904, 7
  %907 = vset.pattern.permute.xlu0 %v905
  %908 = vperm.xlu0 %907, %v903
  %v909 = vpop.permute.xlu0 %908
  %v910 = vperm.slane %v806, 0
  %v911 = vlaneseq
  %v912 = vshrl.u32 %v911, 7
  %914 = vset.pattern.permute.xlu0 %v912
  %915 = vperm.xlu0 %914, %v910
  %v916 = vpop.permute.xlu0 %915
  %v917 = vperm.slane %v806, 1
  %v918 = vlaneseq
  %v919 = vshrl.u32 %v918, 7
  %921 = vset.pattern.permute.xlu0 %v919
  %922 = vperm.xlu0 %921, %v917
  %v923 = vpop.permute.xlu0 %922
  %v924 = vperm.slane %v806, 2
  %v925 = vlaneseq
  %v926 = vshrl.u32 %v925, 7
  %928 = vset.pattern.permute.xlu0 %v926
  %929 = vperm.xlu0 %928, %v924
  %v930 = vpop.permute.xlu0 %929
  %v931 = vperm.slane %v806, 3
  %v932 = vlaneseq
  %v933 = vshrl.u32 %v932, 7
  %935 = vset.pattern.permute.xlu0 %v933
  %936 = vperm.xlu0 %935, %v931
  %v937 = vpop.permute.xlu0 %936
  %v954 = vmul.f32 %v267, %v832
  %v955 = vmul.f32 %v270, %v839
  %v956 = vmul.f32 %v273, %v846
  %v957 = vmul.f32 %v276, %v853
  %v958 = vmul.f32 %v279, %v860
  %v959 = vmul.f32 %v282, %v867
  %v960 = vmul.f32 %v285, %v874
  %v961 = vmul.f32 %v288, %v881
  %v962 = vmul.f32 %v291, %v888
  %v963 = vmul.f32 %v294, %v895
  %v964 = vmul.f32 %v297, %v902
  %v965 = vmul.f32 %v300, %v909
  %v966 = vmul.f32 %v303, %v916
  %v967 = vmul.f32 %v306, %v923
  %v968 = vmul.f32 %v309, %v930
  %v969 = vmul.f32 %v312, %v937
  %974 = vset.pattern.permute.xlu0 0
  %975 = vperm.xlu0 %974, %v678
  %v976 = vpop.permute.xlu0 %975
  %977 = vset.pattern.permute.xlu0 0
  %978 = vperm.xlu0 %977, %v679
  %v979 = vpop.permute.xlu0 %978
  %980 = vset.pattern.permute.xlu0 0
  %981 = vperm.xlu0 %980, %v680
  %v982 = vpop.permute.xlu0 %981
  %983 = vset.pattern.permute.xlu0 0
  %984 = vperm.xlu0 %983, %v681
  %v985 = vpop.permute.xlu0 %984
  %v986 = vlaneseq
  %v987 = vand.u32 %v986, 127
  %v988 = vperm.slane %v976, %v987
  %v989 = vperm.slane %v979, %v987
  %v990 = vperm.slane %v982, %v987
  %v991 = vperm.slane %v985, %v987
  %vm992 = vcmask 1041409
  %v993 = vsel %vm992, %v989, %v988
  %vm994 = vcmask 1042434
  %v995 = vsel %vm994, %v990, %v993
  %vm996 = vcmask 1043459
  %v997 = vsel %vm996, %v991, %v995
  %vm998 = vcmask 31744
  %v999 = vsel %vm998, %v997, 0
  %vm1001 = vcmask 1043456
  %v1002 = vsel %vm1001, %v35, 0
  %1004 = vmatpush.msra.mxu0 0.0
  %1005 = vmatpush.msra.mxu0 0.0
  %1006 = vmatpush.msra.mxu0 0.0
  %1007 = vmatpush.msra.mxu0 0.0
  %1008 = vmatpush.msra.mxu0 0.0
  %1009 = vmatpush.msra.mxu0 0.0
  %1010 = vmatpush.msra.mxu0 0.0
  %1011 = vmatpush.msra.mxu0 0.0
  %1012 = vmatpush.msra.mxu0 0.0
  %1013 = vmatpush.msra.mxu0 0.0
  %1014 = vmatpush.msra.mxu0 0.0
  %1015 = vmatpush.msra.mxu0 0.0
  %1016 = vmatpush.msra.mxu0 0.0
  %1017 = vmatpush.msra.mxu0 0.0
  %1018 = vmatpush.msra.mxu0 0.0
  %1019 = vmatpush.msra.mxu0 %v1002
  %1020 = vmatmul.f32.gmra.mxu0 %v999
  %v1021 = vpop.f32.mrf.mxu0
  %v1022 = vadd.f32 0.0, %v1021
  %1023 = vdwg.mxu0
  %1028 = vset.pattern.permute.xlu0 0
  %1029 = vperm.xlu0 %1028, %v682
  %v1030 = vpop.permute.xlu0 %1029
  %1031 = vset.pattern.permute.xlu0 0
  %1032 = vperm.xlu0 %1031, %v683
  %v1033 = vpop.permute.xlu0 %1032
  %1034 = vset.pattern.permute.xlu0 0
  %1035 = vperm.xlu0 %1034, %v684
  %v1036 = vpop.permute.xlu0 %1035
  %1037 = vset.pattern.permute.xlu0 0
  %1038 = vperm.xlu0 %1037, %v685
  %v1039 = vpop.permute.xlu0 %1038
  %v1040 = vperm.slane %v1030, %v987
  %v1041 = vperm.slane %v1033, %v987
  %v1042 = vperm.slane %v1036, %v987
  %v1043 = vperm.slane %v1039, %v987
  %v1044 = vsel %vm992, %v1041, %v1040
  %v1045 = vsel %vm994, %v1042, %v1044
  %v1046 = vsel %vm996, %v1043, %v1045
  %v1047 = vsel %vm998, %v1046, 0
  %v1049 = vsel %vm1001, %v36, 0
  %1051 = vmatpush.msra.mxu0 0.0
  %1052 = vmatpush.msra.mxu0 0.0
  %1053 = vmatpush.msra.mxu0 0.0
  %1054 = vmatpush.msra.mxu0 0.0
  %1055 = vmatpush.msra.mxu0 0.0
  %1056 = vmatpush.msra.mxu0 0.0
  %1057 = vmatpush.msra.mxu0 0.0
  %1058 = vmatpush.msra.mxu0 0.0
  %1059 = vmatpush.msra.mxu0 0.0
  %1060 = vmatpush.msra.mxu0 0.0
  %1061 = vmatpush.msra.mxu0 0.0
  %1062 = vmatpush.msra.mxu0 0.0
  %1063 = vmatpush.msra.mxu0 0.0
  %1064 = vmatpush.msra.mxu0 0.0
  %1065 = vmatpush.msra.mxu0 0.0
  %1066 = vmatpush.msra.mxu0 %v1049
  %1067 = vmatmul.f32.gmra.mxu0 %v1047
  %v1068 = vpop.f32.mrf.mxu0
  %v1069 = vadd.f32 0.0, %v1068
  %1070 = vdwg.mxu0
  %1075 = vset.pattern.permute.xlu0 0
  %1076 = vperm.xlu0 %1075, %v686
  %v1077 = vpop.permute.xlu0 %1076
  %1078 = vset.pattern.permute.xlu0 0
  %1079 = vperm.xlu0 %1078, %v687
  %v1080 = vpop.permute.xlu0 %1079
  %1081 = vset.pattern.permute.xlu0 0
  %1082 = vperm.xlu0 %1081, %v688
  %v1083 = vpop.permute.xlu0 %1082
  %1084 = vset.pattern.permute.xlu0 0
  %1085 = vperm.xlu0 %1084, %v689
  %v1086 = vpop.permute.xlu0 %1085
  %v1087 = vperm.slane %v1077, %v987
  %v1088 = vperm.slane %v1080, %v987
  %v1089 = vperm.slane %v1083, %v987
  %v1090 = vperm.slane %v1086, %v987
  %v1091 = vsel %vm992, %v1088, %v1087
  %v1092 = vsel %vm994, %v1089, %v1091
  %v1093 = vsel %vm996, %v1090, %v1092
  %v1094 = vsel %vm998, %v1093, 0
  %v1096 = vsel %vm1001, %v37, 0
  %1098 = vmatpush.msra.mxu0 0.0
  %1099 = vmatpush.msra.mxu0 0.0
  %1100 = vmatpush.msra.mxu0 0.0
  %1101 = vmatpush.msra.mxu0 0.0
  %1102 = vmatpush.msra.mxu0 0.0
  %1103 = vmatpush.msra.mxu0 0.0
  %1104 = vmatpush.msra.mxu0 0.0
  %1105 = vmatpush.msra.mxu0 0.0
  %1106 = vmatpush.msra.mxu0 0.0
  %1107 = vmatpush.msra.mxu0 0.0
  %1108 = vmatpush.msra.mxu0 0.0
  %1109 = vmatpush.msra.mxu0 0.0
  %1110 = vmatpush.msra.mxu0 0.0
  %1111 = vmatpush.msra.mxu0 0.0
  %1112 = vmatpush.msra.mxu0 0.0
  %1113 = vmatpush.msra.mxu0 %v1096
  %1114 = vmatmul.f32.gmra.mxu0 %v1094
  %v1115 = vpop.f32.mrf.mxu0
  %v1116 = vadd.f32 0.0, %v1115
  %1117 = vdwg.mxu0
  %1122 = vset.pattern.permute.xlu0 0
  %1123 = vperm.xlu0 %1122, %v690
  %v1124 = vpop.permute.xlu0 %1123
  %1125 = vset.pattern.permute.xlu0 0
  %1126 = vperm.xlu0 %1125, %v691
  %v1127 = vpop.permute.xlu0 %1126
  %1128 = vset.pattern.permute.xlu0 0
  %1129 = vperm.xlu0 %1128, %v692
  %v1130 = vpop.permute.xlu0 %1129
  %1131 = vset.pattern.permute.xlu0 0
  %1132 = vperm.xlu0 %1131, %v693
  %v1133 = vpop.permute.xlu0 %1132
  %v1134 = vperm.slane %v1124, %v987
  %v1135 = vperm.slane %v1127, %v987
  %v1136 = vperm.slane %v1130, %v987
  %v1137 = vperm.slane %v1133, %v987
  %v1138 = vsel %vm992, %v1135, %v1134
  %v1139 = vsel %vm994, %v1136, %v1138
  %v1140 = vsel %vm996, %v1137, %v1139
  %v1141 = vsel %vm998, %v1140, 0
  %v1143 = vsel %vm1001, %v38, 0
  %1145 = vmatpush.msra.mxu0 0.0
  %1146 = vmatpush.msra.mxu0 0.0
  %1147 = vmatpush.msra.mxu0 0.0
  %1148 = vmatpush.msra.mxu0 0.0
  %1149 = vmatpush.msra.mxu0 0.0
  %1150 = vmatpush.msra.mxu0 0.0
  %1151 = vmatpush.msra.mxu0 0.0
  %1152 = vmatpush.msra.mxu0 0.0
  %1153 = vmatpush.msra.mxu0 0.0
  %1154 = vmatpush.msra.mxu0 0.0
  %1155 = vmatpush.msra.mxu0 0.0
  %1156 = vmatpush.msra.mxu0 0.0
  %1157 = vmatpush.msra.mxu0 0.0
  %1158 = vmatpush.msra.mxu0 0.0
  %1159 = vmatpush.msra.mxu0 0.0
  %1160 = vmatpush.msra.mxu0 %v1143
  %1161 = vmatmul.f32.gmra.mxu0 %v1141
  %v1162 = vpop.f32.mrf.mxu0
  %v1163 = vadd.f32 0.0, %v1162
  %1164 = vdwg.mxu0
  %1169 = vset.pattern.permute.xlu0 0
  %1170 = vperm.xlu0 %1169, %v954
  %v1171 = vpop.permute.xlu0 %1170
  %1172 = vset.pattern.permute.xlu0 0
  %1173 = vperm.xlu0 %1172, %v955
  %v1174 = vpop.permute.xlu0 %1173
  %1175 = vset.pattern.permute.xlu0 0
  %1176 = vperm.xlu0 %1175, %v956
  %v1177 = vpop.permute.xlu0 %1176
  %1178 = vset.pattern.permute.xlu0 0
  %1179 = vperm.xlu0 %1178, %v957
  %v1180 = vpop.permute.xlu0 %1179
  %v1181 = vperm.slane %v1171, %v987
  %v1182 = vperm.slane %v1174, %v987
  %v1183 = vperm.slane %v1177, %v987
  %v1184 = vperm.slane %v1180, %v987
  %v1185 = vsel %vm992, %v1182, %v1181
  %v1186 = vsel %vm994, %v1183, %v1185
  %v1187 = vsel %vm996, %v1184, %v1186
  %v1188 = vsel %vm998, %v1187, 0
  %v1190 = vsel %vm1001, %v31, 0
  %1192 = vmatpush.msra.mxu0 0.0
  %1193 = vmatpush.msra.mxu0 0.0
  %1194 = vmatpush.msra.mxu0 0.0
  %1195 = vmatpush.msra.mxu0 0.0
  %1196 = vmatpush.msra.mxu0 0.0
  %1197 = vmatpush.msra.mxu0 0.0
  %1198 = vmatpush.msra.mxu0 0.0
  %1199 = vmatpush.msra.mxu0 0.0
  %1200 = vmatpush.msra.mxu0 0.0
  %1201 = vmatpush.msra.mxu0 0.0
  %1202 = vmatpush.msra.mxu0 0.0
  %1203 = vmatpush.msra.mxu0 0.0
  %1204 = vmatpush.msra.mxu0 0.0
  %1205 = vmatpush.msra.mxu0 0.0
  %1206 = vmatpush.msra.mxu0 0.0
  %1207 = vmatpush.msra.mxu0 %v1190
  %1208 = vmatmul.f32.gmra.mxu0 %v1188
  %v1209 = vpop.f32.mrf.mxu0
  %v1210 = vadd.f32 0.0, %v1209
  %1211 = vdwg.mxu0
  %1216 = vset.pattern.permute.xlu0 0
  %1217 = vperm.xlu0 %1216, %v958
  %v1218 = vpop.permute.xlu0 %1217
  %1219 = vset.pattern.permute.xlu0 0
  %1220 = vperm.xlu0 %1219, %v959
  %v1221 = vpop.permute.xlu0 %1220
  %1222 = vset.pattern.permute.xlu0 0
  %1223 = vperm.xlu0 %1222, %v960
  %v1224 = vpop.permute.xlu0 %1223
  %1225 = vset.pattern.permute.xlu0 0
  %1226 = vperm.xlu0 %1225, %v961
  %v1227 = vpop.permute.xlu0 %1226
  %v1228 = vperm.slane %v1218, %v987
  %v1229 = vperm.slane %v1221, %v987
  %v1230 = vperm.slane %v1224, %v987
  %v1231 = vperm.slane %v1227, %v987
  %v1232 = vsel %vm992, %v1229, %v1228
  %v1233 = vsel %vm994, %v1230, %v1232
  %v1234 = vsel %vm996, %v1231, %v1233
  %v1235 = vsel %vm998, %v1234, 0
  %v1237 = vsel %vm1001, %v32, 0
  %1239 = vmatpush.msra.mxu0 0.0
  %1240 = vmatpush.msra.mxu0 0.0
  %1241 = vmatpush.msra.mxu0 0.0
  %1242 = vmatpush.msra.mxu0 0.0
  %1243 = vmatpush.msra.mxu0 0.0
  %1244 = vmatpush.msra.mxu0 0.0
  %1245 = vmatpush.msra.mxu0 0.0
  %1246 = vmatpush.msra.mxu0 0.0
  %1247 = vmatpush.msra.mxu0 0.0
  %1248 = vmatpush.msra.mxu0 0.0
  %1249 = vmatpush.msra.mxu0 0.0
  %1250 = vmatpush.msra.mxu0 0.0
  %1251 = vmatpush.msra.mxu0 0.0
  %1252 = vmatpush.msra.mxu0 0.0
  %1253 = vmatpush.msra.mxu0 0.0
  %1254 = vmatpush.msra.mxu0 %v1237
  %1255 = vmatmul.f32.gmra.mxu0 %v1235
  %v1256 = vpop.f32.mrf.mxu0
  %v1257 = vadd.f32 0.0, %v1256
  %1258 = vdwg.mxu0
  %1263 = vset.pattern.permute.xlu0 0
  %1264 = vperm.xlu0 %1263, %v962
  %v1265 = vpop.permute.xlu0 %1264
  %1266 = vset.pattern.permute.xlu0 0
  %1267 = vperm.xlu0 %1266, %v963
  %v1268 = vpop.permute.xlu0 %1267
  %1269 = vset.pattern.permute.xlu0 0
  %1270 = vperm.xlu0 %1269, %v964
  %v1271 = vpop.permute.xlu0 %1270
  %1272 = vset.pattern.permute.xlu0 0
  %1273 = vperm.xlu0 %1272, %v965
  %v1274 = vpop.permute.xlu0 %1273
  %v1275 = vperm.slane %v1265, %v987
  %v1276 = vperm.slane %v1268, %v987
  %v1277 = vperm.slane %v1271, %v987
  %v1278 = vperm.slane %v1274, %v987
  %v1279 = vsel %vm992, %v1276, %v1275
  %v1280 = vsel %vm994, %v1277, %v1279
  %v1281 = vsel %vm996, %v1278, %v1280
  %v1282 = vsel %vm998, %v1281, 0
  %v1284 = vsel %vm1001, %v33, 0
  %1286 = vmatpush.msra.mxu0 0.0
  %1287 = vmatpush.msra.mxu0 0.0
  %1288 = vmatpush.msra.mxu0 0.0
  %1289 = vmatpush.msra.mxu0 0.0
  %1290 = vmatpush.msra.mxu0 0.0
  %1291 = vmatpush.msra.mxu0 0.0
  %1292 = vmatpush.msra.mxu0 0.0
  %1293 = vmatpush.msra.mxu0 0.0
  %1294 = vmatpush.msra.mxu0 0.0
  %1295 = vmatpush.msra.mxu0 0.0
  %1296 = vmatpush.msra.mxu0 0.0
  %1297 = vmatpush.msra.mxu0 0.0
  %1298 = vmatpush.msra.mxu0 0.0
  %1299 = vmatpush.msra.mxu0 0.0
  %1300 = vmatpush.msra.mxu0 0.0
  %1301 = vmatpush.msra.mxu0 %v1284
  %1302 = vmatmul.f32.gmra.mxu0 %v1282
  %v1303 = vpop.f32.mrf.mxu0
  %v1304 = vadd.f32 0.0, %v1303
  %1305 = vdwg.mxu0
  %1310 = vset.pattern.permute.xlu0 0
  %1311 = vperm.xlu0 %1310, %v966
  %v1312 = vpop.permute.xlu0 %1311
  %1313 = vset.pattern.permute.xlu0 0
  %1314 = vperm.xlu0 %1313, %v967
  %v1315 = vpop.permute.xlu0 %1314
  %1316 = vset.pattern.permute.xlu0 0
  %1317 = vperm.xlu0 %1316, %v968
  %v1318 = vpop.permute.xlu0 %1317
  %1319 = vset.pattern.permute.xlu0 0
  %1320 = vperm.xlu0 %1319, %v969
  %v1321 = vpop.permute.xlu0 %1320
  %v1322 = vperm.slane %v1312, %v987
  %v1323 = vperm.slane %v1315, %v987
  %v1324 = vperm.slane %v1318, %v987
  %v1325 = vperm.slane %v1321, %v987
  %v1326 = vsel %vm992, %v1323, %v1322
  %v1327 = vsel %vm994, %v1324, %v1326
  %v1328 = vsel %vm996, %v1325, %v1327
  %v1329 = vsel %vm998, %v1328, 0
  %v1331 = vsel %vm1001, %v34, 0
  %1333 = vmatpush.msra.mxu0 0.0
  %1334 = vmatpush.msra.mxu0 0.0
  %1335 = vmatpush.msra.mxu0 0.0
  %1336 = vmatpush.msra.mxu0 0.0
  %1337 = vmatpush.msra.mxu0 0.0
  %1338 = vmatpush.msra.mxu0 0.0
  %1339 = vmatpush.msra.mxu0 0.0
  %1340 = vmatpush.msra.mxu0 0.0
  %1341 = vmatpush.msra.mxu0 0.0
  %1342 = vmatpush.msra.mxu0 0.0
  %1343 = vmatpush.msra.mxu0 0.0
  %1344 = vmatpush.msra.mxu0 0.0
  %1345 = vmatpush.msra.mxu0 0.0
  %1346 = vmatpush.msra.mxu0 0.0
  %1347 = vmatpush.msra.mxu0 0.0
  %1348 = vmatpush.msra.mxu0 %v1331
  %1349 = vmatmul.f32.gmra.mxu0 %v1329
  %v1350 = vpop.f32.mrf.mxu0
  %v1351 = vadd.f32 0.0, %v1350
  %1352 = vdwg.mxu0
  %v1353 = vsel %vm317, %v1022, 0.0
  %v1354 = vrot.slane %v1353, 4
  %v1355 = vadd.f32 %v1353, %v1354
  %v1356 = vrot.slane %v1355, 2
  %v1357 = vadd.f32 %v1355, %v1356
  %v1358 = vrot.slane %v1357, 1
  %v1359 = vadd.f32 %v1357, %v1358
  %v1360 = vsel %vm317, %v1069, 0.0
  %v1361 = vrot.slane %v1360, 4
  %v1362 = vadd.f32 %v1360, %v1361
  %v1363 = vrot.slane %v1362, 2
  %v1364 = vadd.f32 %v1362, %v1363
  %v1365 = vrot.slane %v1364, 1
  %v1366 = vadd.f32 %v1364, %v1365
  %v1367 = vsel %vm317, %v1116, 0.0
  %v1368 = vrot.slane %v1367, 4
  %v1369 = vadd.f32 %v1367, %v1368
  %v1370 = vrot.slane %v1369, 2
  %v1371 = vadd.f32 %v1369, %v1370
  %v1372 = vrot.slane %v1371, 1
  %v1373 = vadd.f32 %v1371, %v1372
  %v1374 = vsel %vm317, %v1163, 0.0
  %v1375 = vrot.slane %v1374, 4
  %v1376 = vadd.f32 %v1374, %v1375
  %v1377 = vrot.slane %v1376, 2
  %v1378 = vadd.f32 %v1376, %v1377
  %v1379 = vrot.slane %v1378, 1
  %v1380 = vadd.f32 %v1378, %v1379
  %v1381 = vmax.f32 %v1359, 0.0
  %v1382 = vmax.f32 %v1366, 0.0
  %v1383 = vmax.f32 %v1373, 0.0
  %v1384 = vmax.f32 %v1380, 0.0
  %v1385 = vsel %vm317, %v1210, 0.0
  %v1386 = vrot.slane %v1385, 4
  %v1387 = vadd.f32 %v1385, %v1386
  %v1388 = vrot.slane %v1387, 2
  %v1389 = vadd.f32 %v1387, %v1388
  %v1390 = vrot.slane %v1389, 1
  %v1391 = vadd.f32 %v1389, %v1390
  %v1392 = vsel %vm317, %v1257, 0.0
  %v1393 = vrot.slane %v1392, 4
  %v1394 = vadd.f32 %v1392, %v1393
  %v1395 = vrot.slane %v1394, 2
  %v1396 = vadd.f32 %v1394, %v1395
  %v1397 = vrot.slane %v1396, 1
  %v1398 = vadd.f32 %v1396, %v1397
  %v1399 = vsel %vm317, %v1304, 0.0
  %v1400 = vrot.slane %v1399, 4
  %v1401 = vadd.f32 %v1399, %v1400
  %v1402 = vrot.slane %v1401, 2
  %v1403 = vadd.f32 %v1401, %v1402
  %v1404 = vrot.slane %v1403, 1
  %v1405 = vadd.f32 %v1403, %v1404
  %v1406 = vsel %vm317, %v1351, 0.0
  %v1407 = vrot.slane %v1406, 4
  %v1408 = vadd.f32 %v1406, %v1407
  %v1409 = vrot.slane %v1408, 2
  %v1410 = vadd.f32 %v1408, %v1409
  %v1411 = vrot.slane %v1410, 1
  %v1412 = vadd.f32 %v1410, %v1411
  %v1413 = vmax.f32 %v1391, 0.0
  %v1414 = vmax.f32 %v1398, 0.0
  %v1415 = vmax.f32 %v1405, 0.0
  %v1416 = vmax.f32 %v1412, 0.0
  %v1418 = vperm.slane %v57, 0
  %v1420 = vmul.f32 %v1381, %v1418
  %v1421 = vmul.f32 %v1382, %v1418
  %v1422 = vmul.f32 %v1383, %v1418
  %v1423 = vmul.f32 %v1384, %v1418
  %1424 = vrot.lane.b32.xlu0 %v1418, 64
  %v1425 = vpop.permute.xlu0 %1424
  %v1427 = vmul.f32 %v1413, %v1425
  %v1428 = vmul.f32 %v1414, %v1425
  %v1429 = vmul.f32 %v1415, %v1425
  %v1430 = vmul.f32 %v1416, %v1425
  %v1431 = vadd.f32 %v1420, %v1427
  %v1432 = vadd.f32 %v1421, %v1428
  %v1433 = vadd.f32 %v1422, %v1429
  %v1434 = vadd.f32 %v1423, %v1430
  %v1439 = vrot.slane %v1432, 7
  %v1440 = vsel %vm992, %v1439, %v1431
  %v1441 = vrot.slane %v1433, 6
  %v1442 = vsel %vm994, %v1441, %v1440
  %v1443 = vrot.slane %v1434, 5
  %v1444 = vsel %vm996, %v1443, %v1442
  %v1446 = vsel %vm317, %v1444, 0.0
  %1447 = vadd.xlane.f32.xlu0 %v1446
  %v1448 = vpop.xlane.xlu0 %1447
  %v1450 = vperm.slane %v58, 0
  %v1452 = vadd.f32 %v1448, %v1450
  %vm1453 = vcmask 3072
  %1454 = vst.msk [vmem:[%s8] sm:$0xf] %vm1453, %v1452
  // Predicated region
  $region34: #{tpu_custom_call.1} parent=0 // pred_check
    _
  $region35: #{tpu_custom_call.1} parent=0 // pred_check_branch
    %1456 = sbr.rel (0) target = $region37
  $region36: #{tpu_custom_call.1} parent=0 // pred_region
    _
  $region37: #{tpu_custom_call.1} parent=0 // pred_fallthru
    _
  // Predicated region
  $region38: #{tpu_custom_call.1} parent=0 // pred_check
    _
  $region39: #{tpu_custom_call.1} parent=0 // pred_check_branch
    %1458 = sbr.rel (0) target = $region41
  $region40: #{tpu_custom_call.1} parent=0 // pred_region
    _
  $region41: #{tpu_custom_call.1} parent=0 // pred_fallthru
    _

</llo_original>
